<compile_context>
chip_gen: v5e
topology: v5e:2x2
jax: 0.10.0
libtpu: 0.0.40
codegen_flags: <defaults>
</compile_context>

<pallas_src>
import functools
from collections import namedtuple

import jax
import jax.numpy as jnp
from jax import lax
from jax.experimental import pallas as pl
from jax.experimental.pallas import tpu as pltpu

BN_EPS = 1e-5
ACT_DTYPE = jnp.bfloat16  # dtype of activations written to HBM between kernels

PRIMITIVES = ("none", "skip_connect", "avg_pool_3x3", "std_conv_3x3")
IDX_SKIP = PRIMITIVES.index("skip_connect")
IDX_POOL = PRIMITIVES.index("avg_pool_3x3")
IDX_CONV = PRIMITIVES.index("std_conv_3x3")

# x: (B, H, W, C) activation; if scale/shift are not None the BatchNorm of the producing layer
# is still pending and is applied (per channel) by the consuming kernel.
State = namedtuple("State", ["x", "scale", "shift"])


# ----------------------------------------------------------------------------
# helpers
# ----------------------------------------------------------------------------
def _round_up(x, m):
    return (x + m - 1) // m * m


_VMEM_LIMIT = None


def _default_vmem_limit():
    """Generation-aware scoped-VMEM budget: ~0.7 * physical, capped at 96 MiB."""
    try:
        info = pltpu.get_tpu_info()
        phys = int(getattr(info, "vmem_capacity_bytes", 0) or 0)
    except Exception:
        phys = 0
    if phys <= 0:
        return 32 * 1024 * 1024
    return int(min(96 * 1024 * 1024, max(32 * 1024 * 1024, 0.7 * phys)))


def _cparams(*sems):
    global _VMEM_LIMIT
    if _VMEM_LIMIT is None:
        _VMEM_LIMIT = _default_vmem_limit()
    return pltpu.CompilerParams(dimension_semantics=tuple(sems),
                                vmem_limit_bytes=_VMEM_LIMIT)


def _row_tiling(m, max_tm=512):
    """Row tile (multiple of 16, up to max_tm); M is padded up to a tile multiple.

    This removes the old tm=16 degenerate fallback: small M gets one full-sized tile,
    large M uses max_tm-row tiles with a (masked) padded tail.
    """
    tm = min(max_tm, _round_up(m, 16))
    mp = _round_up(m, tm)
    return tm, mp


def _w_matrix(w_oihw):
    """OIHW conv weight -> (kh*kw*cin, cout) matmul weight (matches im2col column order)."""
    co, ci, kh, kw = w_oihw.shape
    return w_oihw.transpose(2, 3, 1, 0).reshape(kh * kw * ci, co)


def _identity_affine(k):
    return jnp.ones((k,), jnp.float32), jnp.zeros((k,), jnp.float32)


def _bn_affine(stats, n, eps=BN_EPS):
    """Per-channel (scale, shift) from (sum, sumsq) so that BN(x) == x*scale + shift."""
    mean = stats[0] / n
    # E[x^2] - mean^2 is cancellation-prone; clamp at 0 to stay finite.
    var = jnp.maximum(stats[1] / n - mean * mean, 0.0)
    scale = lax.rsqrt(var + eps)
    shift = -mean * scale
    return scale, shift


class KeyGen:
    def __init__(self, seed):
        self._key = jax.random.PRNGKey(seed)

    def __call__(self):
        self._key, sub = jax.random.split(self._key)
        return sub


# ----------------------------------------------------------------------------
# Pallas kernels
# ----------------------------------------------------------------------------
def _mm_fused_kernel(a_ref, scale_ref, shift_ref, w_ref, y_ref, stats_ref, *, relu, m_valid):
    """a*scale+shift -> [ReLU] -> bf16 matmul (f32 acc) -> y + per-tile (sum, sumsq) stats."""
    a = a_ref[...].astype(jnp.float32)
    a = a * scale_ref[...] + shift_ref[...]
    if relu:
        a = jnp.maximum(a, 0.0)
    tm = a.shape[0]
    if m_valid % tm != 0:
        # ragged / padded tail: zero invalid rows so stats and matmul rows stay exact
        row = pl.program_id(0) * tm + lax.broadcasted_iota(jnp.int32, a.shape, 0)
        a = jnp.where(row < m_valid, a, 0.0)
    y = jnp.dot(a.astype(jnp.bfloat16), w_ref[...], preferred_element_type=jnp.float32)
    y_ref[...] = y.astype(y_ref.dtype)
    s = jnp.sum(y, axis=0, keepdims=True)
    sq = jnp.sum(y * y, axis=0, keepdims=True)
    stats_ref[...] = jnp.concatenate([s, sq], axis=0)[None]


def pallas_matmul_bn(a, w, scale, shift, *, relu, out_dtype=ACT_DTYPE):
    """y = [ReLU](a*scale+shift) @ w, plus per-channel (sum, sumsq) of y.

    Stats are emitted per row-tile (disjoint blocks) so the M grid axis is "parallel"
    (v7x dual-TensorCore friendly); the tiny reduction over tiles happens in XLA.
    """
    M, K = a.shape
    K2, N = w.shape
    assert K == K2
    tm, Mp = _row_tiling(M)
    if Mp != M:
        a = jnp.pad(a, ((0, Mp - M), (0, 0)))
    nt = Mp // tm
    y, stats = pl.pallas_call(
        functools.partial(_mm_fused_kernel, relu=relu, m_valid=M),
        grid=(nt,),
        in_specs=[
            pl.BlockSpec((tm, K), lambda m: (m, 0)),
            pl.BlockSpec((1, K), lambda m: (0, 0)),
            pl.BlockSpec((1, K), lambda m: (0, 0)),
            pl.BlockSpec((K, N), lambda m: (0, 0)),
        ],
        out_specs=[
            pl.BlockSpec((tm, N), lambda m: (m, 0)),
            pl.BlockSpec((1, 2, N), lambda m: (m, 0, 0)),
        ],
        out_shape=[
            jax.ShapeDtypeStruct((Mp, N), out_dtype),
            jax.ShapeDtypeStruct((nt, 2, N), jnp.float32),
        ],
        compiler_params=_cparams("parallel"),
    )(a, scale.reshape(1, K).astype(jnp.float32),
      shift.reshape(1, K).astype(jnp.float32), w.astype(jnp.bfloat16))
    return y[:M], jnp.sum(stats, axis=0)


def _fr_kernel(xa_ref, xb_ref, scale_ref, shift_ref, wa_ref, wb_ref, y_ref, stats_ref, *, m_valid):
    """FactorizedReduce: ReLU(affine(x)) -> two 1x1 stride-2 convs -> channel concat, + stats."""
    def half(x_ref, w_ref):
        a = x_ref[...].astype(jnp.float32) * scale_ref[...] + shift_ref[...]
        a = jnp.maximum(a, 0.0)
        tm = a.shape[0]
        if m_valid % tm != 0:
            row = pl.program_id(0) * tm + lax.broadcasted_iota(jnp.int32, a.shape, 0)
            a = jnp.where(row < m_valid, a, 0.0)
        return jnp.dot(a.astype(jnp.bfloat16), w_ref[...], preferred_element_type=jnp.float32)

    y = jnp.concatenate([half(xa_ref, wa_ref), half(xb_ref, wb_ref)], axis=1)
    y_ref[...] = y.astype(y_ref.dtype)
    s = jnp.sum(y, axis=0, keepdims=True)
    sq = jnp.sum(y * y, axis=0, keepdims=True)
    stats_ref[...] = jnp.concatenate([s, sq], axis=0)[None]


def pallas_factorized_reduce(xa, xb, scale, shift, wa, wb, out_dtype=ACT_DTYPE):
    """Both halves are written by one kernel (no XLA concatenate of activations / stats)."""
    M, Cin = xa.shape
    Ch = wa.shape[1]
    N = 2 * Ch
    tm, Mp = _row_tiling(M)
    if Mp != M:
        xa = jnp.pad(xa, ((0, Mp - M), (0, 0)))
        xb = jnp.pad(xb, ((0, Mp - M), (0, 0)))
    nt = Mp // tm
    y, stats = pl.pallas_call(
        functools.partial(_fr_kernel, m_valid=M),
        grid=(nt,),
        in_specs=[
            pl.BlockSpec((tm, Cin), lambda m: (m, 0)),
            pl.BlockSpec((tm, Cin), lambda m: (m, 0)),
            pl.BlockSpec((1, Cin), lambda m: (0, 0)),
            pl.BlockSpec((1, Cin), lambda m: (0, 0)),
            pl.BlockSpec((Cin, Ch), lambda m: (0, 0)),
            pl.BlockSpec((Cin, Ch), lambda m: (0, 0)),
        ],
        out_specs=[
            pl.BlockSpec((tm, N), lambda m: (m, 0)),
            pl.BlockSpec((1, 2, N), lambda m: (m, 0, 0)),
        ],
        out_shape=[
            jax.ShapeDtypeStruct((Mp, N), out_dtype),
            jax.ShapeDtypeStruct((nt, 2, N), jnp.float32),
        ],
        compiler_params=_cparams("parallel"),
    )(xa, xb, scale.reshape(1, Cin).astype(jnp.float32),
      shift.reshape(1, Cin).astype(jnp.float32),
      wa.astype(jnp.bfloat16), wb.astype(jnp.bfloat16))
    return y[:M], jnp.sum(stats, axis=0)


def _stats_kernel(x_ref, stats_ref):
    x = x_ref[...].astype(jnp.float32)
    s = jnp.sum(x, axis=0, keepdims=True)
    sq = jnp.sum(x * x, axis=0, keepdims=True)
    stats_ref[...] = jnp.concatenate([s, sq], axis=0)[None]


def pallas_channel_stats(x):
    """Per-channel (sum, sumsq) of an (M, C) slab (per-tile partials, reduced in XLA)."""
    M, C = x.shape
    tm, Mp = _row_tiling(M)
    if Mp != M:
        x = jnp.pad(x, ((0, Mp - M), (0, 0)))      # zero rows contribute 0 to both sums
    nt = Mp // tm
    stats = pl.pallas_call(
        _stats_kernel,
        grid=(nt,),
        in_specs=[pl.BlockSpec((tm, C), lambda m: (m, 0))],
        out_specs=pl.BlockSpec((1, 2, C), lambda m: (m, 0, 0)),
        out_shape=jax.ShapeDtypeStruct((nt, 2, C), jnp.float32),
        compiler_params=_cparams("parallel"),
    )(x)
    return jnp.sum(stats, axis=0)


def _affine_kernel(x_ref, scale_ref, shift_ref, o_ref):
    o_ref[...] = (x_ref[...].astype(jnp.float32) * scale_ref[...] + shift_ref[...]).astype(o_ref.dtype)


def pallas_affine_apply(x, scale, shift, out_dtype=ACT_DTYPE):
    """Explicit BN scale/shift pass (only needed for the fan-out points: preprocessed states)."""
    M, C = x.shape
    tm, Mp = _row_tiling(M)
    if Mp != M:
        x = jnp.pad(x, ((0, Mp - M), (0, 0)))
    out = pl.pallas_call(
        _affine_kernel,
        grid=(Mp // tm,),
        in_specs=[
            pl.BlockSpec((tm, C), lambda m: (m, 0)),
            pl.BlockSpec((1, C), lambda m: (0, 0)),
            pl.BlockSpec((1, C), lambda m: (0, 0)),
        ],
        out_specs=pl.BlockSpec((tm, C), lambda m: (m, 0)),
        out_shape=jax.ShapeDtypeStruct((Mp, C), out_dtype),
        compiler_params=_cparams("parallel"),
    )(x, scale.reshape(1, C).astype(jnp.float32), shift.reshape(1, C).astype(jnp.float32))
    return out[:M]


def _combine_kernel(*refs, n_terms):
    """out[b] = bias[b] + sum_t coef[b, t] * slab_t[b]; also emits per-sample channel sums.

    coef/bias already contain the per-sample Gumbel weights and every branch's BN
    scale/shift, so all branch inputs stay pre-BN in HBM and are read exactly once.
    """
    coef_ref, bias_ref = refs[0], refs[1]
    slab_refs = refs[2:2 + n_terms]
    o_ref, sum_ref = refs[2 + n_terms], refs[3 + n_terms]
    hw, c = o_ref.shape[1], o_ref.shape[2]
    acc = jnp.broadcast_to(bias_ref[0].astype(jnp.float32), (hw, c))
    for t in range(n_terms):
        acc = acc + coef_ref[0, t:t + 1, :] * slab_refs[t][0].astype(jnp.float32)
    o_ref[...] = acc[None].astype(o_ref.dtype)
    sum_ref[...] = jnp.sum(acc, axis=0, keepdims=True)[None]


def pallas_combine(coef, bias, slabs, out_dtype=ACT_DTYPE):
    """Weighted combine of mixed-op branches per sample.  coef: (B, n_terms, C), bias: (B,1,C)."""
    # TODO(synk): for large feature maps, additionally tile the HW axis (per-sample blocks are
    # fine at DARTS search resolutions but can grow for bigger inputs).
    B, n_terms, C = coef.shape
    HW = slabs[0].shape[1]
    in_specs = [pl.BlockSpec((1, n_terms, C), lambda b: (b, 0, 0)),
                pl.BlockSpec((1, 1, C), lambda b: (b, 0, 0))]
    in_specs += [pl.BlockSpec((1, HW, C), lambda b: (b, 0, 0)) for _ in slabs]
    out, sums = pl.pallas_call(
        functools.partial(_combine_kernel, n_terms=n_terms),
        grid=(B,),
        in_specs=in_specs,
        out_specs=[pl.BlockSpec((1, HW, C), lambda b: (b, 0, 0)),
                   pl.BlockSpec((1, 1, C), lambda b: (b, 0, 0))],
        out_shape=[jax.ShapeDtypeStruct((B, HW, C), out_dtype),
                   jax.ShapeDtypeStruct((B, 1, C), jnp.float32)],
        compiler_params=_cparams("parallel"),
    )(coef.astype(jnp.float32), bias.astype(jnp.float32), *slabs)
    return out, sums[:, 0, :]


def _head_kernel(x_ref, w_ref, b_ref, o_ref):
    o_ref[...] = (jnp.dot(x_ref[...], w_ref[...], preferred_element_type=jnp.float32)
                  + b_ref[...]).astype(o_ref.dtype)


def pallas_head(pooled, lin_w, lin_b):
    """Classifier: one batched (B, C) @ (C, 128-padded) matmul (GAP reuses combine's sums)."""
    B, C = pooled.shape
    n_cls = lin_w.shape[0]
    ncp = _round_up(n_cls, 128)                       # lane-dense output columns
    Bp = _round_up(B, 8)
    xp = jnp.pad(pooled.astype(jnp.float32), ((0, Bp - B), (0, 0)))
    wp = jnp.zeros((C, ncp), jnp.float32).at[:, :n_cls].set(lin_w.T.astype(jnp.float32))
    bp = jnp.zeros((1, ncp), jnp.float32).at[:, :n_cls].set(lin_b.astype(jnp.float32)[None])
    out = pl.pallas_call(
        _head_kernel,
        grid=(1,),
        in_specs=[
            pl.BlockSpec((Bp, C), lambda i: (0, 0)),
            pl.BlockSpec((C, ncp), lambda i: (0, 0)),
            pl.BlockSpec((1, ncp), lambda i: (0, 0)),
        ],
        out_specs=pl.BlockSpec((Bp, ncp), lambda i: (0, 0)),
        out_shape=jax.ShapeDtypeStruct((Bp, ncp), jnp.float32),
        compiler_params=_cparams("arbitrary"),
    )(xp, wp, bp)
    return out[:B, :n_cls]


# ----------------------------------------------------------------------------
# conv / pool building blocks (im2col / pool glue in XLA, matmul/BN/combine in Pallas)
# ----------------------------------------------------------------------------
def _im2col_nhwc(x, k, stride, pad):
    """Patch extraction for NHWC conv; column (K) ordering is (kh, kw, cin)."""
    # TODO(synk): fold the k*k shifted windows into the matmul kernel (shifted index_maps /
    # manual DMAs) to avoid materializing ~k^2 x the activation bytes in HBM.
    B, H, W, C = x.shape
    Ho = (H + 2 * pad - k) // stride + 1
    Wo = (W + 2 * pad - k) // stride + 1
    if k == 1 and pad == 0:
        return x[:, ::stride, ::stride, :].reshape(B * Ho * Wo, C)
    xp = jnp.pad(x, ((0, 0), (pad, pad), (pad, pad), (0, 0)))
    cols = []
    for i in range(k):
        for j in range(k):
            cols.append(xp[:, i:i + stride * Ho:stride, j:j + stride * Wo:stride, :])
    return jnp.concatenate(cols, axis=-1).reshape(B * Ho * Wo, k * k * C)


def avg_pool_3x3(x, stride):
    """AvgPool2d(3, stride, padding=1, count_include_pad=False), NHWC."""
    # TODO(synk): the pool itself still runs as XLA reduce_windows; its BatchNorm stats and
    # scale/shift are handled by Pallas kernels (stats) / folded into the combine kernel.
    xf = x.astype(jnp.float32)
    window, strides = (1, 3, 3, 1), (1, stride, stride, 1)
    pads = ((0, 0), (1, 1), (1, 1), (0, 0))
    s = lax.reduce_window(xf, 0.0, lax.add, window, strides, pads)
    cnt = lax.reduce_window(jnp.ones((1, x.shape[1], x.shape[2], 1), jnp.float32),
                            0.0, lax.add, window, strides, pads)
    return s / cnt


def preprocess_std(state, w_oihw):
    """ReLU -> Conv1x1(bias=False) -> BN; the producer's pending BN affine is fused on A."""
    B, H, W, Cin = state.x.shape
    Cout = w_oihw.shape[0]
    M = B * H * W
    scale, shift = ((state.scale, state.shift) if state.scale is not None
                    else _identity_affine(Cin))
    y, stats = pallas_matmul_bn(state.x.reshape(M, Cin), _w_matrix(w_oihw),
                                scale, shift, relu=True)
    s2, h2 = _bn_affine(stats, M)
    applied = pallas_affine_apply(y, s2, h2)          # fan-out point -> apply once explicitly
    return applied.reshape(B, H, W, Cout)


def preprocess_fr(state, w1, w2):
    """ReLU -> FactorizedReduce (two stride-2 1x1 convs, even/odd offsets) -> BN."""
    B, H, W, Cin = state.x.shape
    Ho, Wo = H // 2, W // 2
    xa = state.x[:, 0:2 * Ho:2, 0:2 * Wo:2, :].reshape(-1, Cin)
    xb = state.x[:, 1:2 * Ho:2, 1:2 * Wo:2, :].reshape(-1, Cin)
    scale, shift = ((state.scale, state.shift) if state.scale is not None
                    else _identity_affine(Cin))
    y, stats = pallas_factorized_reduce(xa, xb, scale, shift, _w_matrix(w1), _w_matrix(w2))
    M = B * Ho * Wo
    s2, h2 = _bn_affine(stats, M)
    applied = pallas_affine_apply(y, s2, h2)
    return applied.reshape(B, Ho, Wo, 2 * w1.shape[0])


def fr_branch(x_applied, w1, w2):
    """skip_connect on a reduction edge: output stays pre-BN, (scale, shift) folded into combine."""
    B, H, W, Cin = x_applied.shape
    Ho, Wo = H // 2, W // 2
    xa = x_applied[:, 0:2 * Ho:2, 0:2 * Wo:2, :].reshape(-1, Cin)
    xb = x_applied[:, 1:2 * Ho:2, 1:2 * Wo:2, :].reshape(-1, Cin)
    scale, shift = _identity_affine(Cin)
    y, stats = pallas_factorized_reduce(xa, xb, scale, shift, _w_matrix(w1), _w_matrix(w2))
    M = B * Ho * Wo
    s2, h2 = _bn_affine(stats, M)
    return y.reshape(B, Ho * Wo, 2 * w1.shape[0]), s2, h2


# ----------------------------------------------------------------------------
# search cell / full model
# ----------------------------------------------------------------------------
def cell_forward(s0, s1, weights, cell):
    if cell["reduction_p"]:
        p0 = preprocess_fr(s0, cell["pre0"]["w1"], cell["pre0"]["w2"])
    else:
        p0 = preprocess_std(s0, cell["pre0"]["w"])
    p1 = preprocess_std(s1, cell["pre1"]["w"])

    B, Hc, Wc, C = p1.shape
    reduction = cell["reduction"]
    n_nodes = len(cell["dag"])
    Ho, Wo = (Hc // 2, Wc // 2) if reduction else (Hc, Wc)
    HWo = Ho * Wo

    states = [p0, p1]              # applied NHWC activations
    branch_cache = {}              # per-state shared branch outputs (pool / fused conv / skip)
    node_sums = []

    def build_cache(j):
        x = states[j]
        stride = 2 if (reduction and j < 2) else 1
        Bx, H, W_, Cx = x.shape
        Hj, Wj = H // stride, W_ // stride
        M = Bx * Hj * Wj
        # pool branch: shared by every consuming node; its BN is folded into combine
        pooled = avg_pool_3x3(x, stride)
        ps, ph = _bn_affine(pallas_channel_stats(pooled.reshape(M, Cx)), M)
        # conv branch: fuse the 3x3 weights of all consuming edges -> one im2col read,
        # one lane-denser matmul; BN stats come back per fused channel block
        consumers = [i for i in range(n_nodes) if j <= i + 1]
        wfused = jnp.concatenate(
            [_w_matrix(cell["dag"][i][j]["conv_w"]) for i in consumers], axis=1)
        col = _im2col_nhwc(x, 3, stride, 1)
        idk_s, idk_h = _identity_affine(9 * Cx)
        cy, cstats = pallas_matmul_bn(col, wfused, idk_s, idk_h, relu=True)
        cs, ch = _bn_affine(cstats, M)
        branch_cache[j] = dict(
            stride=stride,
            skip=x.reshape(Bx, H * W_, Cx) if stride == 1 else None,
            pool=(pooled.reshape(Bx, Hj * Wj, Cx), ps, ph),
            conv=(cy.reshape(Bx, Hj * Wj, len(consumers) * Cx), cs, ch, consumers),
        )

    for i, edges in enumerate(cell["dag"]):
        w_node = weights[i]                              # (B, i+2, n_ops), Gumbel-softmax weights
        slabs, coefs = [], []
        bias = jnp.zeros((B, C), jnp.float32)
        for j in range(i + 2):
            if j not in branch_cache:
                build_cache(j)
            cache = branch_cache[j]
            w_skip = w_node[:, j, IDX_SKIP:IDX_SKIP + 1]
            w_pool = w_node[:, j, IDX_POOL:IDX_POOL + 1]
            w_conv = w_node[:, j, IDX_CONV:IDX_CONV + 1]
            # --- skip_connect ---
            if cache["stride"] == 1:
                slabs.append(cache["skip"])
                coefs.append(jnp.broadcast_to(w_skip, (B, C)))
            else:
                fr_y, fr_s, fr_h = fr_branch(states[j], edges[j]["fr_w1"], edges[j]["fr_w2"])
                slabs.append(fr_y)
                coefs.append(w_skip * fr_s[None])
                bias = bias + w_skip * fr_h[None]
            # --- avg_pool_3x3 (BN folded into combine) ---
            p_slab, p_s, p_h = cache["pool"]
            slabs.append(p_slab)
            coefs.append(w_pool * p_s[None])
            bias = bias + w_pool * p_h[None]
            # --- std_conv_3x3 (fused weights; slice this node's channel block) ---
            c_slab, c_s, c_h, consumers = cache["conv"]
            pos = consumers.index(i)
            slabs.append(c_slab[:, :, pos * C:(pos + 1) * C])
            coefs.append(w_conv * c_s[pos * C:(pos + 1) * C][None])
            bias = bias + w_conv * c_h[pos * C:(pos + 1) * C][None]
            # PRIMITIVES[0] == "none" contributes w * 0 and is skipped exactly.
        coef = jnp.stack(coefs, axis=1)                  # (B, 3*(i+2), C)
        node_x, node_sum = pallas_combine(coef, bias[:, None, :], slabs)
        states.append(node_x.reshape(B, Ho, Wo, C))
        node_sums.append(node_sum)

    out_x = jnp.concatenate(states[2:], axis=-1)                        # (B, Ho, Wo, n_nodes*C)
    out_gap = jnp.concatenate(node_sums, axis=-1) / float(HWo)          # free GAP for the head
    return State(out_x, None, None), out_gap


def init_conv_w(kg, c_out, c_in, k):
    fan_in = c_in * k * k
    std = (2.0 / fan_in) ** 0.5
    return std * jax.random.normal(kg(), (c_out, c_in, k, k), jnp.float32)


def init_cell(kg, n_nodes, C_pp, C_p, C, reduction_p, reduction):
    cell = {"reduction": reduction, "reduction_p": reduction_p}
    if reduction_p:
        cell["pre0"] = {"w1": init_conv_w(kg, C // 2, C_pp, 1),
                        "w2": init_conv_w(kg, C // 2, C_pp, 1)}
    else:
        cell["pre0"] = {"w": init_conv_w(kg, C, C_pp, 1)}
    cell["pre1"] = {"w": init_conv_w(kg, C, C_p, 1)}
    dag = []
    for i in range(n_nodes):
        edges = []
        for j in range(i + 2):
            stride = 2 if (reduction and j < 2) else 1
            edge = {"conv_w": init_conv_w(kg, C, C, 3)}
            if stride == 2:
                edge["fr_w1"] = init_conv_w(kg, C // 2, C, 1)
                edge["fr_w2"] = init_conv_w(kg, C // 2, C, 1)
            edges.append(edge)
        dag.append(edges)
    cell["dag"] = dag
    return cell


def init_model(kg, C_in, C, n_classes, n_layers, n_nodes, stem_multiplier, t):
    n_ops = len(PRIMITIVES)
    params = {"t": float(t)}
    C_cur = stem_multiplier * C
    params["stem_w"] = init_conv_w(kg, C_cur, C_in, 3)
    C_pp, C_p, C_cur = C_cur, C_cur, C
    cells = []
    reduction_p = False
    for i in range(n_layers):
        if i in (n_layers // 3, 2 * n_layers // 3):
            C_cur *= 2
            reduction = True
        else:
            reduction = False
        cells.append(init_cell(kg, n_nodes, C_pp, C_p, C_cur, reduction_p, reduction))
        reduction_p = reduction
        C_pp, C_p = C_p, C_cur * n_nodes
    params["cells"] = cells
    params["lin_w"] = (1.0 / C_p ** 0.5) * jax.random.normal(kg(), (n_classes, C_p), jnp.float32)
    params["lin_b"] = jnp.zeros((n_classes,), jnp.float32)
    params["q_gamma_normal"] = [
        0.001 * jax.random.normal(kg(), (i + 2, n_ops), jnp.float32) for i in range(n_nodes)]
    params["q_gamma_reduce"] = [
        0.001 * jax.random.normal(kg(), (i + 2, n_ops), jnp.float32) for i in range(n_nodes)]
    return params


def lvar_search_cnn_forward(params, x_nchw, rng):
    """Forward of LVarSearchCNN (stochastic_w disabled via disable_w, stochastic_gamma on)."""
    B = x_nchw.shape[0]
    t = params["t"]
    x = jnp.transpose(x_nchw, (0, 2, 3, 1)).astype(jnp.float32)    # NCHW -> NHWC once
    Bx, H, W, Cin = x.shape

    # stem: Conv3x3(pad=1, bias=False) -> BatchNorm2d; the BN apply is deferred and fused
    # into every consumer's A-side affine (no separate BN pass over the stem output).
    stem_w = params["stem_w"]
    col = _im2col_nhwc(x, 3, 1, 1)
    id_s, id_h = _identity_affine(9 * Cin)
    y, stats = pallas_matmul_bn(col, _w_matrix(stem_w), id_s, id_h, relu=False)
    sc, sh = _bn_affine(stats, Bx * H * W)
    s0 = s1 = State(y.reshape(Bx, H, W, stem_w.shape[0]), sc, sh)

    gap = None
    for cell in params["cells"]:
        gammas = params["q_gamma_reduce"] if cell["reduction"] else params["q_gamma_normal"]
        weights = []
        for gamma in gammas:
            rng, sub = jax.random.split(rng)
            g = jax.random.gumbel(sub, (B,) + gamma.shape, jnp.float32)
            # RelaxedOneHotCategorical(t, logits=gamma).rsample([B]) == softmax((logits+G)/t)
            weights.append(jax.nn.softmax((gamma[None] + g) / t, axis=-1))
        new_state, gap = cell_forward(s0, s1, weights, cell)
        s0, s1 = s1, new_state

    # AdaptiveAvgPool2d(1) already came for free out of the last cell's combine kernels.
    return pallas_head(gap, params["lin_w"], params["lin_b"])


if __name__ == "__main__":
    # small config: C_in=3, C=4, n_classes=10, n_layers=3 (reductions at layers 1,2),
    # n_nodes=2, stem_multiplier=3, t=1.0; input x: (2, 3, 16, 16)
    C_in, C, n_classes, n_layers, n_nodes, stem_mult = 3, 4, 10, 3, 2, 3
    kg = KeyGen(0)
    params = init_model(kg, C_in, C, n_classes, n_layers, n_nodes, stem_mult, t=1.0)

    x = jax.random.normal(jax.random.PRNGKey(0), (2, C_in, 16, 16), jnp.float32)
    logits = lvar_search_cnn_forward(params, x, jax.random.PRNGKey(123))
    jax.block_until_ready(logits)

    assert logits.shape == (2, n_classes), logits.shape
    assert bool(jnp.all(jnp.isfinite(logits)))
    print("KERNEL_OK")
</pallas_src>

<mosaic_0001>
module attributes {stable_mosaic.version = 11 : i64} {
  func.func @_mm_fused_kernel(%arg0: i32, %arg1: memref<512x27xf32, #tpu.memory_space<vmem>>, %arg2: memref<1x27xf32, #tpu.memory_space<vmem>>, %arg3: memref<1x27xf32, #tpu.memory_space<vmem>>, %arg4: memref<27x12xbf16, #tpu.memory_space<vmem>>, %arg5: memref<512x12xbf16, #tpu.memory_space<vmem>>, %arg6: memref<1x2x12xf32, #tpu.memory_space<vmem>>) attributes {dimension_semantics = [#tpu.dimension_semantics<parallel>], iteration_bounds = array<i64: 1>, scalar_prefetch = 0 : i64, scratch_operands = 0 : i64, tpu.core_type = #tpu.core_type<tc>, window_params = [{transform_indices = @transform_0, window_bounds = array<i64: 512, 27>}, {pipeline_mode = #tpu.pipeline_mode<synchronous>, transform_indices = @transform_1, window_bounds = array<i64: 1, 27>}, {pipeline_mode = #tpu.pipeline_mode<synchronous>, transform_indices = @transform_2, window_bounds = array<i64: 1, 27>}, {pipeline_mode = #tpu.pipeline_mode<synchronous>, transform_indices = @transform_3, window_bounds = array<i64: 27, 12>}, {transform_indices = @transform_4, window_bounds = array<i64: 512, 12>}, {transform_indices = @transform_5, window_bounds = array<i64: 1, 2, 12>}]} {
    %c0 = arith.constant 0 : index
    %c0_0 = arith.constant 0 : index
    %0 = vector.load %arg1[%c0, %c0_0] : memref<512x27xf32, #tpu.memory_space<vmem>>, vector<512x27xf32>
    %c0_1 = arith.constant 0 : index
    %c0_2 = arith.constant 0 : index
    %1 = vector.load %arg2[%c0_1, %c0_2] : memref<1x27xf32, #tpu.memory_space<vmem>>, vector<1x27xf32>
    %2 = vector.broadcast %1 : vector<1x27xf32> to vector<512x27xf32>
    %3 = arith.mulf %0, %2 : vector<512x27xf32>
    %c0_3 = arith.constant 0 : index
    %c0_4 = arith.constant 0 : index
    %4 = vector.load %arg3[%c0_3, %c0_4] : memref<1x27xf32, #tpu.memory_space<vmem>>, vector<1x27xf32>
    %5 = vector.broadcast %4 : vector<1x27xf32> to vector<512x27xf32>
    %6 = arith.addf %3, %5 : vector<512x27xf32>
    %7 = arith.truncf %6 : vector<512x27xf32> to vector<512x27xbf16>
    %c0_5 = arith.constant 0 : index
    %c0_6 = arith.constant 0 : index
    %8 = vector.load %arg4[%c0_5, %c0_6] : memref<27x12xbf16, #tpu.memory_space<vmem>>, vector<27x12xbf16>
    %cst = arith.constant dense<0.000000e+00> : vector<512x12xf32>
    %9 = tpu.matmul %7, %8, %cst {dimension_numbers = #tpu.dot_dimension_numbers<[1], [0], [0], [1], [0, 0, 1, 1], [], []>} : vector<512x27xbf16>, vector<27x12xbf16>, vector<512x12xf32> -> vector<512x12xf32>
    %10 = arith.truncf %9 : vector<512x12xf32> to vector<512x12xbf16>
    %c0_7 = arith.constant 0 : index
    %c0_8 = arith.constant 0 : index
    %11 = vector.load %arg5[%c0_7, %c0_8] : memref<512x12xbf16, #tpu.memory_space<vmem>>, vector<512x12xbf16>
    tpu.vector_store %arg5[%c0_7, %c0_8], %10 {strides = array<i32>} : memref<512x12xbf16, #tpu.memory_space<vmem>>, vector<512x12xbf16>,
    %cst_9 = arith.constant dense<0.000000e+00> : vector<12xf32>
    %12 = vector.multi_reduction <add>, %9, %cst_9 [0] : vector<512x12xf32> to vector<12xf32>
    %13 = vector.shape_cast %12 : vector<12xf32> to vector<1x12xf32>
    %14 = arith.mulf %9, %9 : vector<512x12xf32>
    %cst_10 = arith.constant dense<0.000000e+00> : vector<12xf32>
    %15 = vector.multi_reduction <add>, %14, %cst_10 [0] : vector<512x12xf32> to vector<12xf32>
    %16 = vector.shape_cast %15 : vector<12xf32> to vector<1x12xf32>
    %17 = tpu.concatenate %13, %16 in 0 : vector<1x12xf32>, vector<1x12xf32> -> vector<2x12xf32>
    %18 = vector.shape_cast %17 : vector<2x12xf32> to vector<1x2x12xf32>
    %c0_11 = arith.constant 0 : index
    %c0_12 = arith.constant 0 : index
    %c0_13 = arith.constant 0 : index
    %19 = vector.load %arg6[%c0_11, %c0_12, %c0_13] : memref<1x2x12xf32, #tpu.memory_space<vmem>>, vector<1x2x12xf32>
    tpu.vector_store %arg6[%c0_11, %c0_12, %c0_13], %18 {strides = array<i32>} : memref<1x2x12xf32, #tpu.memory_space<vmem>>, vector<1x2x12xf32>,
    return
  }
  func.func @transform_0(%arg0: i32) -> (i32, i32) {
    %c0_i32 = arith.constant 0 : i32
    %c0_i32_0 = arith.constant 0 : i32
    return %arg0, %c0_i32 : i32, i32
  }
  func.func @transform_1(%arg0: i32) -> (i32, i32) {
    %c0_i32 = arith.constant 0 : i32
    %c0_i32_0 = arith.constant 0 : i32
    %c0_i32_1 = arith.constant 0 : i32
    return %c0_i32, %c0_i32_0 : i32, i32
  }
  func.func @transform_2(%arg0: i32) -> (i32, i32) {
    %c0_i32 = arith.constant 0 : i32
    %c0_i32_0 = arith.constant 0 : i32
    %c0_i32_1 = arith.constant 0 : i32
    return %c0_i32, %c0_i32_0 : i32, i32
  }
  func.func @transform_3(%arg0: i32) -> (i32, i32) {
    %c0_i32 = arith.constant 0 : i32
    %c0_i32_0 = arith.constant 0 : i32
    %c0_i32_1 = arith.constant 0 : i32
    return %c0_i32, %c0_i32_0 : i32, i32
  }
  func.func @transform_4(%arg0: i32) -> (i32, i32) {
    %c0_i32 = arith.constant 0 : i32
    %c0_i32_0 = arith.constant 0 : i32
    return %arg0, %c0_i32 : i32, i32
  }
  func.func @transform_5(%arg0: i32) -> (i32, i32, i32) {
    %c0_i32 = arith.constant 0 : i32
    %c0_i32_0 = arith.constant 0 : i32
    %c0_i32_1 = arith.constant 0 : i32
    return %arg0, %c0_i32, %c0_i32_0 : i32, i32, i32
  }
}

</mosaic_0001>

<llo_original>
// kernel: tpu_custom_call.1
$region0: #{tpu_custom_call.1}
  #allocation0 [shape = 'u32[]', space=smem, size = 0x4, offset = 0x4, fixed_abs, tag = 'smem constant byte address 0x4 - core index']
  #allocation1 [shape = 'u32[72,128]{1,0:T(1,128)}', space=vmem, size = 0x9000, scoped, tag = 'internal scratch']
  %s0 = inlined_call_operand.vmem [shape: f32[512,27], index: 0, kind: input, shape index: {}]
  %s1 = inlined_call_operand.vmem [shape: f32[1,27], index: 1, kind: input, shape index: {}]
  %s2 = inlined_call_operand.vmem [shape: f32[1,27], index: 2, kind: input, shape index: {}]
  %s3 = inlined_call_operand.vmem [shape: bf16[27,12], index: 3, kind: input, shape index: {}]
  %s4 = inlined_call_operand.vmem [shape: bf16[512,12], index: 4, kind: output, shape index: {0}]
  %s5 = inlined_call_operand.hbm [shape: f32[1,2,12], index: 5, kind: output, shape index: {1}]
  %6 = xla_tuple %s4, %s5
  %s7 = sld [smem:[#allocation0]]
  $region34: #{tpu_custom_call.1} parent=0
    _
  %s9 = ssub.s32 1, %s7
  %s10 = scalar_select 0, %s9, %s7
  $region1: #{tpu_custom_call.1} parent=0
    #allocation2 [shape = 'u8[1024]{0}', space=vmem, size = 0x400, scoped, tag = 'output window, operand 1, single buffered']
    #allocation3 [shape = 's32[1]{0}', space=sflag, size = 0x4, scoped, tag = 'scoped memory for tpu_custom_call.1']
    %11 = vsyncpa [#allocation3], 0
    // Predicated region
    $region2: #{tpu_custom_call.1} parent=1 // pred_check
      _
    $region3: #{tpu_custom_call.1} parent=1 // pred_check_branch
      %13 = sbr.rel (0) target = $region5
    $region4: #{tpu_custom_call.1} parent=1 // pred_region
      _
    $region5: #{tpu_custom_call.1} parent=1 // pred_fallthru
      _
    // Predicated region
    $region6: #{tpu_custom_call.1} parent=1 // pred_check
      _
    $region7: #{tpu_custom_call.1} parent=1 // pred_check_branch
      %15 = sbr.rel (0) target = $region9
    $region8: #{tpu_custom_call.1} parent=1 // pred_region
      _
    $region9: #{tpu_custom_call.1} parent=1 // pred_fallthru
      _
    // Predicated region
    $region10: #{tpu_custom_call.1} parent=1 // pred_check
      _
    $region11: #{tpu_custom_call.1} parent=1 // pred_check_branch
      %17 = sbr.rel (0) target = $region13
    $region12: #{tpu_custom_call.1} parent=1 // pred_region
      _
    $region13: #{tpu_custom_call.1} parent=1 // pred_fallthru
      _
    // Predicated region
    $region14: #{tpu_custom_call.1} parent=1 // pred_check
      _
    $region15: #{tpu_custom_call.1} parent=1 // pred_check_branch
      %19 = sbr.rel (0) target = $region17
    $region16: #{tpu_custom_call.1} parent=1 // pred_region
      _
    $region17: #{tpu_custom_call.1} parent=1 // pred_fallthru
      _
    %v21 = vld [vmem:[%s0] sm:$0xff]
    %v22 = vld [vmem:[%s0 + $0x8] sm:$0xff]
    %v23 = vld [vmem:[%s0 + $0x10] sm:$0xff]
    %v24 = vld [vmem:[%s0 + $0x18] sm:$0xff]
    %v25 = vld [vmem:[%s0 + $0x20] sm:$0xff]
    %v26 = vld [vmem:[%s0 + $0x28] sm:$0xff]
    %v27 = vld [vmem:[%s0 + $0x30] sm:$0xff]
    %v28 = vld [vmem:[%s0 + $0x38] sm:$0xff]
    %v29 = vld [vmem:[%s0 + $0x40] sm:$0xff]
    %v30 = vld [vmem:[%s0 + $0x48] sm:$0xff]
    %v31 = vld [vmem:[%s0 + $0x50] sm:$0xff]
    %v32 = vld [vmem:[%s0 + $0x58] sm:$0xff]
    %v33 = vld [vmem:[%s0 + $0x60] sm:$0xff]
    %v34 = vld [vmem:[%s0 + $0x68] sm:$0xff]
    %v35 = vld [vmem:[%s0 + $0x70] sm:$0xff]
    %v36 = vld [vmem:[%s0 + $0x78] sm:$0xff]
    %v37 = vld [vmem:[%s0 + $0x80] sm:$0xff]
    %v38 = vld [vmem:[%s0 + $0x88] sm:$0xff]
    %v39 = vld [vmem:[%s0 + $0x90] sm:$0xff]
    %v40 = vld [vmem:[%s0 + $0x98] sm:$0xff]
    %v41 = vld [vmem:[%s0 + $0xa0] sm:$0xff]
    %v42 = vld [vmem:[%s0 + $0xa8] sm:$0xff]
    %v43 = vld [vmem:[%s0 + $0xb0] sm:$0xff]
    %v44 = vld [vmem:[%s0 + $0xb8] sm:$0xff]
    %v45 = vld [vmem:[%s0 + $0xc0] sm:$0xff]
    %v46 = vld [vmem:[%s0 + $0xc8] sm:$0xff]
    %v47 = vld [vmem:[%s0 + $0xd0] sm:$0xff]
    %v48 = vld [vmem:[%s0 + $0xd8] sm:$0xff]
    %v49 = vld [vmem:[%s0 + $0xe0] sm:$0xff]
    %v50 = vld [vmem:[%s0 + $0xe8] sm:$0xff]
    %v51 = vld [vmem:[%s0 + $0xf0] sm:$0xff]
    %v52 = vld [vmem:[%s0 + $0xf8] sm:$0xff]
    %v53 = vld [vmem:[%s0 + $0x100] sm:$0xff]
    %v54 = vld [vmem:[%s0 + $0x108] sm:$0xff]
    %v55 = vld [vmem:[%s0 + $0x110] sm:$0xff]
    %v56 = vld [vmem:[%s0 + $0x118] sm:$0xff]
    %v57 = vld [vmem:[%s0 + $0x120] sm:$0xff]
    %v58 = vld [vmem:[%s0 + $0x128] sm:$0xff]
    %v59 = vld [vmem:[%s0 + $0x130] sm:$0xff]
    %v60 = vld [vmem:[%s0 + $0x138] sm:$0xff]
    %v61 = vld [vmem:[%s0 + $0x140] sm:$0xff]
    %v62 = vld [vmem:[%s0 + $0x148] sm:$0xff]
    %v63 = vld [vmem:[%s0 + $0x150] sm:$0xff]
    %v64 = vld [vmem:[%s0 + $0x158] sm:$0xff]
    %v65 = vld [vmem:[%s0 + $0x160] sm:$0xff]
    %v66 = vld [vmem:[%s0 + $0x168] sm:$0xff]
    %v67 = vld [vmem:[%s0 + $0x170] sm:$0xff]
    %v68 = vld [vmem:[%s0 + $0x178] sm:$0xff]
    %v69 = vld [vmem:[%s0 + $0x180] sm:$0xff]
    %v70 = vld [vmem:[%s0 + $0x188] sm:$0xff]
    %v71 = vld [vmem:[%s0 + $0x190] sm:$0xff]
    %v72 = vld [vmem:[%s0 + $0x198] sm:$0xff]
    %v73 = vld [vmem:[%s0 + $0x1a0] sm:$0xff]
    %v74 = vld [vmem:[%s0 + $0x1a8] sm:$0xff]
    %v75 = vld [vmem:[%s0 + $0x1b0] sm:$0xff]
    %v76 = vld [vmem:[%s0 + $0x1b8] sm:$0xff]
    %v77 = vld [vmem:[%s0 + $0x1c0] sm:$0xff]
    %v78 = vld [vmem:[%s0 + $0x1c8] sm:$0xff]
    %v79 = vld [vmem:[%s0 + $0x1d0] sm:$0xff]
    %v80 = vld [vmem:[%s0 + $0x1d8] sm:$0xff]
    %v81 = vld [vmem:[%s0 + $0x1e0] sm:$0xff]
    %v82 = vld [vmem:[%s0 + $0x1e8] sm:$0xff]
    %v83 = vld [vmem:[%s0 + $0x1f0] sm:$0xff]
    %v84 = vld [vmem:[%s0 + $0x1f8] sm:$0xff]
    %v85 = vld [vmem:[%s1] sm:$0x1]
    %v87 = vperm.slane %v85, 0
    %v89 = vmul.f32 %v21, %v87
    %v90 = vmul.f32 %v22, %v87
    %v91 = vmul.f32 %v23, %v87
    %v92 = vmul.f32 %v24, %v87
    %v93 = vmul.f32 %v25, %v87
    %v94 = vmul.f32 %v26, %v87
    %v95 = vmul.f32 %v27, %v87
    %v96 = vmul.f32 %v28, %v87
    %v97 = vmul.f32 %v29, %v87
    %v98 = vmul.f32 %v30, %v87
    %v99 = vmul.f32 %v31, %v87
    %v100 = vmul.f32 %v32, %v87
    %v101 = vmul.f32 %v33, %v87
    %v102 = vmul.f32 %v34, %v87
    %v103 = vmul.f32 %v35, %v87
    %v104 = vmul.f32 %v36, %v87
    %v105 = vmul.f32 %v37, %v87
    %v106 = vmul.f32 %v38, %v87
    %v107 = vmul.f32 %v39, %v87
    %v108 = vmul.f32 %v40, %v87
    %v109 = vmul.f32 %v41, %v87
    %v110 = vmul.f32 %v42, %v87
    %v111 = vmul.f32 %v43, %v87
    %v112 = vmul.f32 %v44, %v87
    %v113 = vmul.f32 %v45, %v87
    %v114 = vmul.f32 %v46, %v87
    %v115 = vmul.f32 %v47, %v87
    %v116 = vmul.f32 %v48, %v87
    %v117 = vmul.f32 %v49, %v87
    %v118 = vmul.f32 %v50, %v87
    %v119 = vmul.f32 %v51, %v87
    %v120 = vmul.f32 %v52, %v87
    %v121 = vmul.f32 %v53, %v87
    %v122 = vmul.f32 %v54, %v87
    %v123 = vmul.f32 %v55, %v87
    %v124 = vmul.f32 %v56, %v87
    %v125 = vmul.f32 %v57, %v87
    %v126 = vmul.f32 %v58, %v87
    %v127 = vmul.f32 %v59, %v87
    %v128 = vmul.f32 %v60, %v87
    %v129 = vmul.f32 %v61, %v87
    %v130 = vmul.f32 %v62, %v87
    %v131 = vmul.f32 %v63, %v87
    %v132 = vmul.f32 %v64, %v87
    %v133 = vmul.f32 %v65, %v87
    %v134 = vmul.f32 %v66, %v87
    %v135 = vmul.f32 %v67, %v87
    %v136 = vmul.f32 %v68, %v87
    %v137 = vmul.f32 %v69, %v87
    %v138 = vmul.f32 %v70, %v87
    %v139 = vmul.f32 %v71, %v87
    %v140 = vmul.f32 %v72, %v87
    %v141 = vmul.f32 %v73, %v87
    %v142 = vmul.f32 %v74, %v87
    %v143 = vmul.f32 %v75, %v87
    %v144 = vmul.f32 %v76, %v87
    %v145 = vmul.f32 %v77, %v87
    %v146 = vmul.f32 %v78, %v87
    %v147 = vmul.f32 %v79, %v87
    %v148 = vmul.f32 %v80, %v87
    %v149 = vmul.f32 %v81, %v87
    %v150 = vmul.f32 %v82, %v87
    %v151 = vmul.f32 %v83, %v87
    %v152 = vmul.f32 %v84, %v87
    %v153 = vld [vmem:[%s2] sm:$0x1]
    %v155 = vperm.slane %v153, 0
    %v157 = vadd.f32 %v89, %v155
    %v158 = vadd.f32 %v90, %v155
    %v159 = vadd.f32 %v91, %v155
    %v160 = vadd.f32 %v92, %v155
    %v161 = vadd.f32 %v93, %v155
    %v162 = vadd.f32 %v94, %v155
    %v163 = vadd.f32 %v95, %v155
    %v164 = vadd.f32 %v96, %v155
    %v165 = vadd.f32 %v97, %v155
    %v166 = vadd.f32 %v98, %v155
    %v167 = vadd.f32 %v99, %v155
    %v168 = vadd.f32 %v100, %v155
    %v169 = vadd.f32 %v101, %v155
    %v170 = vadd.f32 %v102, %v155
    %v171 = vadd.f32 %v103, %v155
    %v172 = vadd.f32 %v104, %v155
    %v173 = vadd.f32 %v105, %v155
    %v174 = vadd.f32 %v106, %v155
    %v175 = vadd.f32 %v107, %v155
    %v176 = vadd.f32 %v108, %v155
    %v177 = vadd.f32 %v109, %v155
    %v178 = vadd.f32 %v110, %v155
    %v179 = vadd.f32 %v111, %v155
    %v180 = vadd.f32 %v112, %v155
    %v181 = vadd.f32 %v113, %v155
    %v182 = vadd.f32 %v114, %v155
    %v183 = vadd.f32 %v115, %v155
    %v184 = vadd.f32 %v116, %v155
    %v185 = vadd.f32 %v117, %v155
    %v186 = vadd.f32 %v118, %v155
    %v187 = vadd.f32 %v119, %v155
    %v188 = vadd.f32 %v120, %v155
    %v189 = vadd.f32 %v121, %v155
    %v190 = vadd.f32 %v122, %v155
    %v191 = vadd.f32 %v123, %v155
    %v192 = vadd.f32 %v124, %v155
    %v193 = vadd.f32 %v125, %v155
    %v194 = vadd.f32 %v126, %v155
    %v195 = vadd.f32 %v127, %v155
    %v196 = vadd.f32 %v128, %v155
    %v197 = vadd.f32 %v129, %v155
    %v198 = vadd.f32 %v130, %v155
    %v199 = vadd.f32 %v131, %v155
    %v200 = vadd.f32 %v132, %v155
    %v201 = vadd.f32 %v133, %v155
    %v202 = vadd.f32 %v134, %v155
    %v203 = vadd.f32 %v135, %v155
    %v204 = vadd.f32 %v136, %v155
    %v205 = vadd.f32 %v137, %v155
    %v206 = vadd.f32 %v138, %v155
    %v207 = vadd.f32 %v139, %v155
    %v208 = vadd.f32 %v140, %v155
    %v209 = vadd.f32 %v141, %v155
    %v210 = vadd.f32 %v142, %v155
    %v211 = vadd.f32 %v143, %v155
    %v212 = vadd.f32 %v144, %v155
    %v213 = vadd.f32 %v145, %v155
    %v214 = vadd.f32 %v146, %v155
    %v215 = vadd.f32 %v147, %v155
    %v216 = vadd.f32 %v148, %v155
    %v217 = vadd.f32 %v149, %v155
    %v218 = vadd.f32 %v150, %v155
    %v219 = vadd.f32 %v151, %v155
    %v220 = vadd.f32 %v152, %v155
    %v221 = vpack.c.bf16 %v158, %v157
    %v222 = vpack.c.bf16 %v160, %v159
    %v223 = vpack.c.bf16 %v162, %v161
    %v224 = vpack.c.bf16 %v164, %v163
    %v225 = vpack.c.bf16 %v166, %v165
    %v226 = vpack.c.bf16 %v168, %v167
    %v227 = vpack.c.bf16 %v170, %v169
    %v228 = vpack.c.bf16 %v172, %v171
    %v229 = vpack.c.bf16 %v174, %v173
    %v230 = vpack.c.bf16 %v176, %v175
    %v231 = vpack.c.bf16 %v178, %v177
    %v232 = vpack.c.bf16 %v180, %v179
    %v233 = vpack.c.bf16 %v182, %v181
    %v234 = vpack.c.bf16 %v184, %v183
    %v235 = vpack.c.bf16 %v186, %v185
    %v236 = vpack.c.bf16 %v188, %v187
    %v237 = vpack.c.bf16 %v190, %v189
    %v238 = vpack.c.bf16 %v192, %v191
    %v239 = vpack.c.bf16 %v194, %v193
    %v240 = vpack.c.bf16 %v196, %v195
    %v241 = vpack.c.bf16 %v198, %v197
    %v242 = vpack.c.bf16 %v200, %v199
    %v243 = vpack.c.bf16 %v202, %v201
    %v244 = vpack.c.bf16 %v204, %v203
    %v245 = vpack.c.bf16 %v206, %v205
    %v246 = vpack.c.bf16 %v208, %v207
    %v247 = vpack.c.bf16 %v210, %v209
    %v248 = vpack.c.bf16 %v212, %v211
    %v249 = vpack.c.bf16 %v214, %v213
    %v250 = vpack.c.bf16 %v216, %v215
    %v251 = vpack.c.bf16 %v218, %v217
    %v252 = vpack.c.bf16 %v220, %v219
    %v253 = vld [vmem:[%s3] sm:$0xf]
    %v254 = vld [vmem:[%s3 + $0x4] sm:$0xf]
    %v255 = vld [vmem:[%s3 + $0x8] sm:$0xf]
    %v256 = vld [vmem:[%s3 + $0xc] sm:$0x3]
    %v261 = vunpack.c.l.b16 %v253
    %v262 = vunpack.c.l.b16 %v254
    %v263 = vunpack.c.l.b16 %v255
    %v264 = vunpack.c.l.b16 %v256
    %v265 = vpack.c.b16 %v262, %v261
    %v266 = vpack.c.b16 %v264, %v263
    %vm268 = vcmask 220160
    %v270 = vsel %vm268, %v221, 0
    %v273 = vsel %vm268, %v222, 0
    %v276 = vsel %vm268, %v223, 0
    %v279 = vsel %vm268, %v224, 0
    %v282 = vsel %vm268, %v225, 0
    %v285 = vsel %vm268, %v226, 0
    %v288 = vsel %vm268, %v227, 0
    %v291 = vsel %vm268, %v228, 0
    %v294 = vsel %vm268, %v229, 0
    %v297 = vsel %vm268, %v230, 0
    %v300 = vsel %vm268, %v231, 0
    %v303 = vsel %vm268, %v232, 0
    %v306 = vsel %vm268, %v233, 0
    %v309 = vsel %vm268, %v234, 0
    %v312 = vsel %vm268, %v235, 0
    %v315 = vsel %vm268, %v236, 0
    %v318 = vsel %vm268, %v237, 0
    %v321 = vsel %vm268, %v238, 0
    %v324 = vsel %vm268, %v239, 0
    %v327 = vsel %vm268, %v240, 0
    %v330 = vsel %vm268, %v241, 0
    %v333 = vsel %vm268, %v242, 0
    %v336 = vsel %vm268, %v243, 0
    %v339 = vsel %vm268, %v244, 0
    %v342 = vsel %vm268, %v245, 0
    %v345 = vsel %vm268, %v246, 0
    %v348 = vsel %vm268, %v247, 0
    %v351 = vsel %vm268, %v248, 0
    %v354 = vsel %vm268, %v249, 0
    %v357 = vsel %vm268, %v250, 0
    %v360 = vsel %vm268, %v251, 0
    %v363 = vsel %vm268, %v252, 0
    %vm365 = vcmask 1044480
    %vm366 = vcmask 1045504
    %v367 = vsel %vm365, 4294967295, 65535
    %v368 = vsel %vm366, %v367, 0
    %v370 = vand.u32 %v266, %v368
    %372 = vmatpush.bf16.msra.mxu0 0
    %373 = vmatpush.bf16.msra.mxu0 0
    %374 = vmatpush.bf16.msra.mxu0 0
    %375 = vmatpush.bf16.msra.mxu0 0
    %376 = vmatpush.bf16.msra.mxu0 0
    %377 = vmatpush.bf16.msra.mxu0 0
    %378 = vmatpush.bf16.msra.mxu0 %v370
    %379 = vmatpush.bf16.msra.mxu0 %v265
    %380 = vmatmul.bf16.gmra.mxu0 %v270
    %v381 = vpop.f32.mrf.mxu0
    %v382 = vadd.f32 0.0, %v381
    %v383 = vpop.f32.mrf.mxu0
    %v384 = vadd.f32 0.0, %v383
    %385 = vmatmul.bf16.gmra.mxu0 %v273
    %v386 = vpop.f32.mrf.mxu0
    %v387 = vadd.f32 0.0, %v386
    %v388 = vpop.f32.mrf.mxu0
    %v389 = vadd.f32 0.0, %v388
    %390 = vmatmul.bf16.gmra.mxu0 %v276
    %v391 = vpop.f32.mrf.mxu0
    %v392 = vadd.f32 0.0, %v391
    %v393 = vpop.f32.mrf.mxu0
    %v394 = vadd.f32 0.0, %v393
    %395 = vmatmul.bf16.gmra.mxu0 %v279
    %v396 = vpop.f32.mrf.mxu0
    %v397 = vadd.f32 0.0, %v396
    %v398 = vpop.f32.mrf.mxu0
    %v399 = vadd.f32 0.0, %v398
    %400 = vmatmul.bf16.gmra.mxu0 %v282
    %v401 = vpop.f32.mrf.mxu0
    %v402 = vadd.f32 0.0, %v401
    %v403 = vpop.f32.mrf.mxu0
    %v404 = vadd.f32 0.0, %v403
    %405 = vmatmul.bf16.gmra.mxu0 %v285
    %v406 = vpop.f32.mrf.mxu0
    %v407 = vadd.f32 0.0, %v406
    %v408 = vpop.f32.mrf.mxu0
    %v409 = vadd.f32 0.0, %v408
    %410 = vmatmul.bf16.gmra.mxu0 %v288
    %v411 = vpop.f32.mrf.mxu0
    %v412 = vadd.f32 0.0, %v411
    %v413 = vpop.f32.mrf.mxu0
    %v414 = vadd.f32 0.0, %v413
    %415 = vmatmul.bf16.gmra.mxu0 %v291
    %v416 = vpop.f32.mrf.mxu0
    %v417 = vadd.f32 0.0, %v416
    %v418 = vpop.f32.mrf.mxu0
    %v419 = vadd.f32 0.0, %v418
    %420 = vmatmul.bf16.gmra.mxu0 %v294
    %v421 = vpop.f32.mrf.mxu0
    %v422 = vadd.f32 0.0, %v421
    %v423 = vpop.f32.mrf.mxu0
    %v424 = vadd.f32 0.0, %v423
    %425 = vmatmul.bf16.gmra.mxu0 %v297
    %v426 = vpop.f32.mrf.mxu0
    %v427 = vadd.f32 0.0, %v426
    %v428 = vpop.f32.mrf.mxu0
    %v429 = vadd.f32 0.0, %v428
    %430 = vmatmul.bf16.gmra.mxu0 %v300
    %v431 = vpop.f32.mrf.mxu0
    %v432 = vadd.f32 0.0, %v431
    %v433 = vpop.f32.mrf.mxu0
    %v434 = vadd.f32 0.0, %v433
    %435 = vmatmul.bf16.gmra.mxu0 %v303
    %v436 = vpop.f32.mrf.mxu0
    %v437 = vadd.f32 0.0, %v436
    %v438 = vpop.f32.mrf.mxu0
    %v439 = vadd.f32 0.0, %v438
    %440 = vmatmul.bf16.gmra.mxu0 %v306
    %v441 = vpop.f32.mrf.mxu0
    %v442 = vadd.f32 0.0, %v441
    %v443 = vpop.f32.mrf.mxu0
    %v444 = vadd.f32 0.0, %v443
    %445 = vmatmul.bf16.gmra.mxu0 %v309
    %v446 = vpop.f32.mrf.mxu0
    %v447 = vadd.f32 0.0, %v446
    %v448 = vpop.f32.mrf.mxu0
    %v449 = vadd.f32 0.0, %v448
    %450 = vmatmul.bf16.gmra.mxu0 %v312
    %v451 = vpop.f32.mrf.mxu0
    %v452 = vadd.f32 0.0, %v451
    %v453 = vpop.f32.mrf.mxu0
    %v454 = vadd.f32 0.0, %v453
    %455 = vmatmul.bf16.gmra.mxu0 %v315
    %v456 = vpop.f32.mrf.mxu0
    %v457 = vadd.f32 0.0, %v456
    %v458 = vpop.f32.mrf.mxu0
    %v459 = vadd.f32 0.0, %v458
    %460 = vmatmul.bf16.gmra.mxu0 %v318
    %v461 = vpop.f32.mrf.mxu0
    %v462 = vadd.f32 0.0, %v461
    %v463 = vpop.f32.mrf.mxu0
    %v464 = vadd.f32 0.0, %v463
    %465 = vmatmul.bf16.gmra.mxu0 %v321
    %v466 = vpop.f32.mrf.mxu0
    %v467 = vadd.f32 0.0, %v466
    %v468 = vpop.f32.mrf.mxu0
    %v469 = vadd.f32 0.0, %v468
    %470 = vmatmul.bf16.gmra.mxu0 %v324
    %v471 = vpop.f32.mrf.mxu0
    %v472 = vadd.f32 0.0, %v471
    %v473 = vpop.f32.mrf.mxu0
    %v474 = vadd.f32 0.0, %v473
    %475 = vmatmul.bf16.gmra.mxu0 %v327
    %v476 = vpop.f32.mrf.mxu0
    %v477 = vadd.f32 0.0, %v476
    %v478 = vpop.f32.mrf.mxu0
    %v479 = vadd.f32 0.0, %v478
    %480 = vmatmul.bf16.gmra.mxu0 %v330
    %v481 = vpop.f32.mrf.mxu0
    %v482 = vadd.f32 0.0, %v481
    %v483 = vpop.f32.mrf.mxu0
    %v484 = vadd.f32 0.0, %v483
    %485 = vmatmul.bf16.gmra.mxu0 %v333
    %v486 = vpop.f32.mrf.mxu0
    %v487 = vadd.f32 0.0, %v486
    %v488 = vpop.f32.mrf.mxu0
    %v489 = vadd.f32 0.0, %v488
    %490 = vmatmul.bf16.gmra.mxu0 %v336
    %v491 = vpop.f32.mrf.mxu0
    %v492 = vadd.f32 0.0, %v491
    %v493 = vpop.f32.mrf.mxu0
    %v494 = vadd.f32 0.0, %v493
    %495 = vmatmul.bf16.gmra.mxu0 %v339
    %v496 = vpop.f32.mrf.mxu0
    %v497 = vadd.f32 0.0, %v496
    %v498 = vpop.f32.mrf.mxu0
    %v499 = vadd.f32 0.0, %v498
    %500 = vmatmul.bf16.gmra.mxu0 %v342
    %v501 = vpop.f32.mrf.mxu0
    %v502 = vadd.f32 0.0, %v501
    %v503 = vpop.f32.mrf.mxu0
    %v504 = vadd.f32 0.0, %v503
    %505 = vmatmul.bf16.gmra.mxu0 %v345
    %v506 = vpop.f32.mrf.mxu0
    %v507 = vadd.f32 0.0, %v506
    %v508 = vpop.f32.mrf.mxu0
    %v509 = vadd.f32 0.0, %v508
    %510 = vmatmul.bf16.gmra.mxu0 %v348
    %v511 = vpop.f32.mrf.mxu0
    %v512 = vadd.f32 0.0, %v511
    %v513 = vpop.f32.mrf.mxu0
    %v514 = vadd.f32 0.0, %v513
    %515 = vmatmul.bf16.gmra.mxu0 %v351
    %v516 = vpop.f32.mrf.mxu0
    %v517 = vadd.f32 0.0, %v516
    %v518 = vpop.f32.mrf.mxu0
    %v519 = vadd.f32 0.0, %v518
    %520 = vmatmul.bf16.gmra.mxu0 %v354
    %v521 = vpop.f32.mrf.mxu0
    %v522 = vadd.f32 0.0, %v521
    %v523 = vpop.f32.mrf.mxu0
    %v524 = vadd.f32 0.0, %v523
    %525 = vmatmul.bf16.gmra.mxu0 %v357
    %v526 = vpop.f32.mrf.mxu0
    %v527 = vadd.f32 0.0, %v526
    %v528 = vpop.f32.mrf.mxu0
    %v529 = vadd.f32 0.0, %v528
    %530 = vmatmul.bf16.gmra.mxu0 %v360
    %v531 = vpop.f32.mrf.mxu0
    %v532 = vadd.f32 0.0, %v531
    %v533 = vpop.f32.mrf.mxu0
    %v534 = vadd.f32 0.0, %v533
    %535 = vmatmul.bf16.gmra.mxu0 %v363
    %v536 = vpop.f32.mrf.mxu0
    %v537 = vadd.f32 0.0, %v536
    %v538 = vpop.f32.mrf.mxu0
    %v539 = vadd.f32 0.0, %v538
    %540 = vdwg.mxu0
    %v541 = vpack.c.bf16 %v382, %v382
    %v542 = vpack.c.bf16 %v384, %v384
    %v543 = vpack.c.bf16 %v387, %v387
    %v544 = vpack.c.bf16 %v389, %v389
    %v545 = vpack.c.bf16 %v392, %v392
    %v546 = vpack.c.bf16 %v394, %v394
    %v547 = vpack.c.bf16 %v397, %v397
    %v548 = vpack.c.bf16 %v399, %v399
    %v549 = vpack.c.bf16 %v402, %v402
    %v550 = vpack.c.bf16 %v404, %v404
    %v551 = vpack.c.bf16 %v407, %v407
    %v552 = vpack.c.bf16 %v409, %v409
    %v553 = vpack.c.bf16 %v412, %v412
    %v554 = vpack.c.bf16 %v414, %v414
    %v555 = vpack.c.bf16 %v417, %v417
    %v556 = vpack.c.bf16 %v419, %v419
    %v557 = vpack.c.bf16 %v422, %v422
    %v558 = vpack.c.bf16 %v424, %v424
    %v559 = vpack.c.bf16 %v427, %v427
    %v560 = vpack.c.bf16 %v429, %v429
    %v561 = vpack.c.bf16 %v432, %v432
    %v562 = vpack.c.bf16 %v434, %v434
    %v563 = vpack.c.bf16 %v437, %v437
    %v564 = vpack.c.bf16 %v439, %v439
    %v565 = vpack.c.bf16 %v442, %v442
    %v566 = vpack.c.bf16 %v444, %v444
    %v567 = vpack.c.bf16 %v447, %v447
    %v568 = vpack.c.bf16 %v449, %v449
    %v569 = vpack.c.bf16 %v452, %v452
    %v570 = vpack.c.bf16 %v454, %v454
    %v571 = vpack.c.bf16 %v457, %v457
    %v572 = vpack.c.bf16 %v459, %v459
    %v573 = vpack.c.bf16 %v462, %v462
    %v574 = vpack.c.bf16 %v464, %v464
    %v575 = vpack.c.bf16 %v467, %v467
    %v576 = vpack.c.bf16 %v469, %v469
    %v577 = vpack.c.bf16 %v472, %v472
    %v578 = vpack.c.bf16 %v474, %v474
    %v579 = vpack.c.bf16 %v477, %v477
    %v580 = vpack.c.bf16 %v479, %v479
    %v581 = vpack.c.bf16 %v482, %v482
    %v582 = vpack.c.bf16 %v484, %v484
    %v583 = vpack.c.bf16 %v487, %v487
    %v584 = vpack.c.bf16 %v489, %v489
    %v585 = vpack.c.bf16 %v492, %v492
    %v586 = vpack.c.bf16 %v494, %v494
    %v587 = vpack.c.bf16 %v497, %v497
    %v588 = vpack.c.bf16 %v499, %v499
    %v589 = vpack.c.bf16 %v502, %v502
    %v590 = vpack.c.bf16 %v504, %v504
    %v591 = vpack.c.bf16 %v507, %v507
    %v592 = vpack.c.bf16 %v509, %v509
    %v593 = vpack.c.bf16 %v512, %v512
    %v594 = vpack.c.bf16 %v514, %v514
    %v595 = vpack.c.bf16 %v517, %v517
    %v596 = vpack.c.bf16 %v519, %v519
    %v597 = vpack.c.bf16 %v522, %v522
    %v598 = vpack.c.bf16 %v524, %v524
    %v599 = vpack.c.bf16 %v527, %v527
    %v600 = vpack.c.bf16 %v529, %v529
    %v601 = vpack.c.bf16 %v532, %v532
    %v602 = vpack.c.bf16 %v534, %v534
    %v603 = vpack.c.bf16 %v537, %v537
    %v604 = vpack.c.bf16 %v539, %v539
    %vm605 = vcmask 93184
    %606 = vst.msk [vmem:[%s4] sm:$0xf] %vm605, %v541
    %607 = vst.msk [vmem:[%s4 + $0x4] sm:$0xf] %vm605, %v542
    %608 = vst.msk [vmem:[%s4 + $0x8] sm:$0xf] %vm605, %v543
    %609 = vst.msk [vmem:[%s4 + $0xc] sm:$0xf] %vm605, %v544
    %610 = vst.msk [vmem:[%s4 + $0x10] sm:$0xf] %vm605, %v545
    %611 = vst.msk [vmem:[%s4 + $0x14] sm:$0xf] %vm605, %v546
    %612 = vst.msk [vmem:[%s4 + $0x18] sm:$0xf] %vm605, %v547
    %613 = vst.msk [vmem:[%s4 + $0x1c] sm:$0xf] %vm605, %v548
    %614 = vst.msk [vmem:[%s4 + $0x20] sm:$0xf] %vm605, %v549
    %615 = vst.msk [vmem:[%s4 + $0x24] sm:$0xf] %vm605, %v550
    %616 = vst.msk [vmem:[%s4 + $0x28] sm:$0xf] %vm605, %v551
    %617 = vst.msk [vmem:[%s4 + $0x2c] sm:$0xf] %vm605, %v552
    %618 = vst.msk [vmem:[%s4 + $0x30] sm:$0xf] %vm605, %v553
    %619 = vst.msk [vmem:[%s4 + $0x34] sm:$0xf] %vm605, %v554
    %620 = vst.msk [vmem:[%s4 + $0x38] sm:$0xf] %vm605, %v555
    %621 = vst.msk [vmem:[%s4 + $0x3c] sm:$0xf] %vm605, %v556
    %622 = vst.msk [vmem:[%s4 + $0x40] sm:$0xf] %vm605, %v557
    %623 = vst.msk [vmem:[%s4 + $0x44] sm:$0xf] %vm605, %v558
    %624 = vst.msk [vmem:[%s4 + $0x48] sm:$0xf] %vm605, %v559
    %625 = vst.msk [vmem:[%s4 + $0x4c] sm:$0xf] %vm605, %v560
    %626 = vst.msk [vmem:[%s4 + $0x50] sm:$0xf] %vm605, %v561
    %627 = vst.msk [vmem:[%s4 + $0x54] sm:$0xf] %vm605, %v562
    %628 = vst.msk [vmem:[%s4 + $0x58] sm:$0xf] %vm605, %v563
    %629 = vst.msk [vmem:[%s4 + $0x5c] sm:$0xf] %vm605, %v564
    %630 = vst.msk [vmem:[%s4 + $0x60] sm:$0xf] %vm605, %v565
    %631 = vst.msk [vmem:[%s4 + $0x64] sm:$0xf] %vm605, %v566
    %632 = vst.msk [vmem:[%s4 + $0x68] sm:$0xf] %vm605, %v567
    %633 = vst.msk [vmem:[%s4 + $0x6c] sm:$0xf] %vm605, %v568
    %634 = vst.msk [vmem:[%s4 + $0x70] sm:$0xf] %vm605, %v569
    %635 = vst.msk [vmem:[%s4 + $0x74] sm:$0xf] %vm605, %v570
    %636 = vst.msk [vmem:[%s4 + $0x78] sm:$0xf] %vm605, %v571
    %637 = vst.msk [vmem:[%s4 + $0x7c] sm:$0xf] %vm605, %v572
    %638 = vst.msk [vmem:[%s4 + $0x80] sm:$0xf] %vm605, %v573
    %639 = vst.msk [vmem:[%s4 + $0x84] sm:$0xf] %vm605, %v574
    %640 = vst.msk [vmem:[%s4 + $0x88] sm:$0xf] %vm605, %v575
    %641 = vst.msk [vmem:[%s4 + $0x8c] sm:$0xf] %vm605, %v576
    %642 = vst.msk [vmem:[%s4 + $0x90] sm:$0xf] %vm605, %v577
    %643 = vst.msk [vmem:[%s4 + $0x94] sm:$0xf] %vm605, %v578
    %644 = vst.msk [vmem:[%s4 + $0x98] sm:$0xf] %vm605, %v579
    %645 = vst.msk [vmem:[%s4 + $0x9c] sm:$0xf] %vm605, %v580
    %646 = vst.msk [vmem:[%s4 + $0xa0] sm:$0xf] %vm605, %v581
    %647 = vst.msk [vmem:[%s4 + $0xa4] sm:$0xf] %vm605, %v582
    %648 = vst.msk [vmem:[%s4 + $0xa8] sm:$0xf] %vm605, %v583
    %649 = vst.msk [vmem:[%s4 + $0xac] sm:$0xf] %vm605, %v584
    %650 = vst.msk [vmem:[%s4 + $0xb0] sm:$0xf] %vm605, %v585
    %651 = vst.msk [vmem:[%s4 + $0xb4] sm:$0xf] %vm605, %v586
    %652 = vst.msk [vmem:[%s4 + $0xb8] sm:$0xf] %vm605, %v587
    %653 = vst.msk [vmem:[%s4 + $0xbc] sm:$0xf] %vm605, %v588
    %654 = vst.msk [vmem:[%s4 + $0xc0] sm:$0xf] %vm605, %v589
    %655 = vst.msk [vmem:[%s4 + $0xc4] sm:$0xf] %vm605, %v590
    %656 = vst.msk [vmem:[%s4 + $0xc8] sm:$0xf] %vm605, %v591
    %657 = vst.msk [vmem:[%s4 + $0xcc] sm:$0xf] %vm605, %v592
    %658 = vst.msk [vmem:[%s4 + $0xd0] sm:$0xf] %vm605, %v593
    %659 = vst.msk [vmem:[%s4 + $0xd4] sm:$0xf] %vm605, %v594
    %660 = vst.msk [vmem:[%s4 + $0xd8] sm:$0xf] %vm605, %v595
    %661 = vst.msk [vmem:[%s4 + $0xdc] sm:$0xf] %vm605, %v596
    %662 = vst.msk [vmem:[%s4 + $0xe0] sm:$0xf] %vm605, %v597
    %663 = vst.msk [vmem:[%s4 + $0xe4] sm:$0xf] %vm605, %v598
    %664 = vst.msk [vmem:[%s4 + $0xe8] sm:$0xf] %vm605, %v599
    %665 = vst.msk [vmem:[%s4 + $0xec] sm:$0xf] %vm605, %v600
    %666 = vst.msk [vmem:[%s4 + $0xf0] sm:$0xf] %vm605, %v601
    %667 = vst.msk [vmem:[%s4 + $0xf4] sm:$0xf] %vm605, %v602
    %668 = vst.msk [vmem:[%s4 + $0xf8] sm:$0xf] %vm605, %v603
    %669 = vst.msk [vmem:[%s4 + $0xfc] sm:$0xf] %vm605, %v604
    %vm670 = vcmask 97280
    %v671 = vsel %vm670, %v382, 0.0
    %v672 = vsel %vm670, %v384, 0.0
    %v673 = vadd.f32 %v671, %v672
    %v674 = vsel %vm670, %v387, 0.0
    %v675 = vadd.f32 %v673, %v674
    %v676 = vsel %vm670, %v389, 0.0
    %v677 = vadd.f32 %v675, %v676
    %v678 = vsel %vm670, %v392, 0.0
    %v679 = vadd.f32 %v677, %v678
    %v680 = vsel %vm670, %v394, 0.0
    %v681 = vadd.f32 %v679, %v680
    %v682 = vsel %vm670, %v397, 0.0
    %v683 = vadd.f32 %v681, %v682
    %v684 = vsel %vm670, %v399, 0.0
    %v685 = vadd.f32 %v683, %v684
    %v686 = vsel %vm670, %v402, 0.0
    %v687 = vadd.f32 %v685, %v686
    %v688 = vsel %vm670, %v404, 0.0
    %v689 = vadd.f32 %v687, %v688
    %v690 = vsel %vm670, %v407, 0.0
    %v691 = vadd.f32 %v689, %v690
    %v692 = vsel %vm670, %v409, 0.0
    %v693 = vadd.f32 %v691, %v692
    %v694 = vsel %vm670, %v412, 0.0
    %v695 = vadd.f32 %v693, %v694
    %v696 = vsel %vm670, %v414, 0.0
    %v697 = vadd.f32 %v695, %v696
    %v698 = vsel %vm670, %v417, 0.0
    %v699 = vadd.f32 %v697, %v698
    %v700 = vsel %vm670, %v419, 0.0
    %v701 = vadd.f32 %v699, %v700
    %v702 = vsel %vm670, %v422, 0.0
    %v703 = vadd.f32 %v701, %v702
    %v704 = vsel %vm670, %v424, 0.0
    %v705 = vadd.f32 %v703, %v704
    %v706 = vsel %vm670, %v427, 0.0
    %v707 = vadd.f32 %v705, %v706
    %v708 = vsel %vm670, %v429, 0.0
    %v709 = vadd.f32 %v707, %v708
    %v710 = vsel %vm670, %v432, 0.0
    %v711 = vadd.f32 %v709, %v710
    %v712 = vsel %vm670, %v434, 0.0
    %v713 = vadd.f32 %v711, %v712
    %v714 = vsel %vm670, %v437, 0.0
    %v715 = vadd.f32 %v713, %v714
    %v716 = vsel %vm670, %v439, 0.0
    %v717 = vadd.f32 %v715, %v716
    %v718 = vsel %vm670, %v442, 0.0
    %v719 = vadd.f32 %v717, %v718
    %v720 = vsel %vm670, %v444, 0.0
    %v721 = vadd.f32 %v719, %v720
    %v722 = vsel %vm670, %v447, 0.0
    %v723 = vadd.f32 %v721, %v722
    %v724 = vsel %vm670, %v449, 0.0
    %v725 = vadd.f32 %v723, %v724
    %v726 = vsel %vm670, %v452, 0.0
    %v727 = vadd.f32 %v725, %v726
    %v728 = vsel %vm670, %v454, 0.0
    %v729 = vadd.f32 %v727, %v728
    %v730 = vsel %vm670, %v457, 0.0
    %v731 = vadd.f32 %v729, %v730
    %v732 = vsel %vm670, %v459, 0.0
    %v733 = vadd.f32 %v731, %v732
    %v734 = vsel %vm670, %v462, 0.0
    %v735 = vadd.f32 %v733, %v734
    %v736 = vsel %vm670, %v464, 0.0
    %v737 = vadd.f32 %v735, %v736
    %v738 = vsel %vm670, %v467, 0.0
    %v739 = vadd.f32 %v737, %v738
    %v740 = vsel %vm670, %v469, 0.0
    %v741 = vadd.f32 %v739, %v740
    %v742 = vsel %vm670, %v472, 0.0
    %v743 = vadd.f32 %v741, %v742
    %v744 = vsel %vm670, %v474, 0.0
    %v745 = vadd.f32 %v743, %v744
    %v746 = vsel %vm670, %v477, 0.0
    %v747 = vadd.f32 %v745, %v746
    %v748 = vsel %vm670, %v479, 0.0
    %v749 = vadd.f32 %v747, %v748
    %v750 = vsel %vm670, %v482, 0.0
    %v751 = vadd.f32 %v749, %v750
    %v752 = vsel %vm670, %v484, 0.0
    %v753 = vadd.f32 %v751, %v752
    %v754 = vsel %vm670, %v487, 0.0
    %v755 = vadd.f32 %v753, %v754
    %v756 = vsel %vm670, %v489, 0.0
    %v757 = vadd.f32 %v755, %v756
    %v758 = vsel %vm670, %v492, 0.0
    %v759 = vadd.f32 %v757, %v758
    %v760 = vsel %vm670, %v494, 0.0
    %v761 = vadd.f32 %v759, %v760
    %v762 = vsel %vm670, %v497, 0.0
    %v763 = vadd.f32 %v761, %v762
    %v764 = vsel %vm670, %v499, 0.0
    %v765 = vadd.f32 %v763, %v764
    %v766 = vsel %vm670, %v502, 0.0
    %v767 = vadd.f32 %v765, %v766
    %v768 = vsel %vm670, %v504, 0.0
    %v769 = vadd.f32 %v767, %v768
    %v770 = vsel %vm670, %v507, 0.0
    %v771 = vadd.f32 %v769, %v770
    %v772 = vsel %vm670, %v509, 0.0
    %v773 = vadd.f32 %v771, %v772
    %v774 = vsel %vm670, %v512, 0.0
    %v775 = vadd.f32 %v773, %v774
    %v776 = vsel %vm670, %v514, 0.0
    %v777 = vadd.f32 %v775, %v776
    %v778 = vsel %vm670, %v517, 0.0
    %v779 = vadd.f32 %v777, %v778
    %v780 = vsel %vm670, %v519, 0.0
    %v781 = vadd.f32 %v779, %v780
    %v782 = vsel %vm670, %v522, 0.0
    %v783 = vadd.f32 %v781, %v782
    %v784 = vsel %vm670, %v524, 0.0
    %v785 = vadd.f32 %v783, %v784
    %v786 = vsel %vm670, %v527, 0.0
    %v787 = vadd.f32 %v785, %v786
    %v788 = vsel %vm670, %v529, 0.0
    %v789 = vadd.f32 %v787, %v788
    %v790 = vsel %vm670, %v532, 0.0
    %v791 = vadd.f32 %v789, %v790
    %v792 = vsel %vm670, %v534, 0.0
    %v793 = vadd.f32 %v791, %v792
    %v794 = vsel %vm670, %v537, 0.0
    %v795 = vadd.f32 %v793, %v794
    %v796 = vsel %vm670, %v539, 0.0
    %v797 = vadd.f32 %v795, %v796
    %v798 = vrot.slane %v797, 4
    %v799 = vadd.f32 %v797, %v798
    %v800 = vrot.slane %v799, 2
    %v801 = vadd.f32 %v799, %v800
    %v802 = vrot.slane %v801, 1
    %v803 = vadd.f32 %v801, %v802
    %v804 = vmul.f32 %v382, %v382
    %v805 = vmul.f32 %v384, %v384
    %v806 = vmul.f32 %v387, %v387
    %v807 = vmul.f32 %v389, %v389
    %v808 = vmul.f32 %v392, %v392
    %v809 = vmul.f32 %v394, %v394
    %v810 = vmul.f32 %v397, %v397
    %v811 = vmul.f32 %v399, %v399
    %v812 = vmul.f32 %v402, %v402
    %v813 = vmul.f32 %v404, %v404
    %v814 = vmul.f32 %v407, %v407
    %v815 = vmul.f32 %v409, %v409
    %v816 = vmul.f32 %v412, %v412
    %v817 = vmul.f32 %v414, %v414
    %v818 = vmul.f32 %v417, %v417
    %v819 = vmul.f32 %v419, %v419
    %v820 = vmul.f32 %v422, %v422
    %v821 = vmul.f32 %v424, %v424
    %v822 = vmul.f32 %v427, %v427
    %v823 = vmul.f32 %v429, %v429
    %v824 = vmul.f32 %v432, %v432
    %v825 = vmul.f32 %v434, %v434
    %v826 = vmul.f32 %v437, %v437
    %v827 = vmul.f32 %v439, %v439
    %v828 = vmul.f32 %v442, %v442
    %v829 = vmul.f32 %v444, %v444
    %v830 = vmul.f32 %v447, %v447
    %v831 = vmul.f32 %v449, %v449
    %v832 = vmul.f32 %v452, %v452
    %v833 = vmul.f32 %v454, %v454
    %v834 = vmul.f32 %v457, %v457
    %v835 = vmul.f32 %v459, %v459
    %v836 = vmul.f32 %v462, %v462
    %v837 = vmul.f32 %v464, %v464
    %v838 = vmul.f32 %v467, %v467
    %v839 = vmul.f32 %v469, %v469
    %v840 = vmul.f32 %v472, %v472
    %v841 = vmul.f32 %v474, %v474
    %v842 = vmul.f32 %v477, %v477
    %v843 = vmul.f32 %v479, %v479
    %v844 = vmul.f32 %v482, %v482
    %v845 = vmul.f32 %v484, %v484
    %v846 = vmul.f32 %v487, %v487
    %v847 = vmul.f32 %v489, %v489
    %v848 = vmul.f32 %v492, %v492
    %v849 = vmul.f32 %v494, %v494
    %v850 = vmul.f32 %v497, %v497
    %v851 = vmul.f32 %v499, %v499
    %v852 = vmul.f32 %v502, %v502
    %v853 = vmul.f32 %v504, %v504
    %v854 = vmul.f32 %v507, %v507
    %v855 = vmul.f32 %v509, %v509
    %v856 = vmul.f32 %v512, %v512
    %v857 = vmul.f32 %v514, %v514
    %v858 = vmul.f32 %v517, %v517
    %v859 = vmul.f32 %v519, %v519
    %v860 = vmul.f32 %v522, %v522
    %v861 = vmul.f32 %v524, %v524
    %v862 = vmul.f32 %v527, %v527
    %v863 = vmul.f32 %v529, %v529
    %v864 = vmul.f32 %v532, %v532
    %v865 = vmul.f32 %v534, %v534
    %v866 = vmul.f32 %v537, %v537
    %v867 = vmul.f32 %v539, %v539
    %v868 = vsel %vm670, %v804, 0.0
    %v869 = vsel %vm670, %v805, 0.0
    %v870 = vadd.f32 %v868, %v869
    %v871 = vsel %vm670, %v806, 0.0
    %v872 = vadd.f32 %v870, %v871
    %v873 = vsel %vm670, %v807, 0.0
    %v874 = vadd.f32 %v872, %v873
    %v875 = vsel %vm670, %v808, 0.0
    %v876 = vadd.f32 %v874, %v875
    %v877 = vsel %vm670, %v809, 0.0
    %v878 = vadd.f32 %v876, %v877
    %v879 = vsel %vm670, %v810, 0.0
    %v880 = vadd.f32 %v878, %v879
    %v881 = vsel %vm670, %v811, 0.0
    %v882 = vadd.f32 %v880, %v881
    %v883 = vsel %vm670, %v812, 0.0
    %v884 = vadd.f32 %v882, %v883
    %v885 = vsel %vm670, %v813, 0.0
    %v886 = vadd.f32 %v884, %v885
    %v887 = vsel %vm670, %v814, 0.0
    %v888 = vadd.f32 %v886, %v887
    %v889 = vsel %vm670, %v815, 0.0
    %v890 = vadd.f32 %v888, %v889
    %v891 = vsel %vm670, %v816, 0.0
    %v892 = vadd.f32 %v890, %v891
    %v893 = vsel %vm670, %v817, 0.0
    %v894 = vadd.f32 %v892, %v893
    %v895 = vsel %vm670, %v818, 0.0
    %v896 = vadd.f32 %v894, %v895
    %v897 = vsel %vm670, %v819, 0.0
    %v898 = vadd.f32 %v896, %v897
    %v899 = vsel %vm670, %v820, 0.0
    %v900 = vadd.f32 %v898, %v899
    %v901 = vsel %vm670, %v821, 0.0
    %v902 = vadd.f32 %v900, %v901
    %v903 = vsel %vm670, %v822, 0.0
    %v904 = vadd.f32 %v902, %v903
    %v905 = vsel %vm670, %v823, 0.0
    %v906 = vadd.f32 %v904, %v905
    %v907 = vsel %vm670, %v824, 0.0
    %v908 = vadd.f32 %v906, %v907
    %v909 = vsel %vm670, %v825, 0.0
    %v910 = vadd.f32 %v908, %v909
    %v911 = vsel %vm670, %v826, 0.0
    %v912 = vadd.f32 %v910, %v911
    %v913 = vsel %vm670, %v827, 0.0
    %v914 = vadd.f32 %v912, %v913
    %v915 = vsel %vm670, %v828, 0.0
    %v916 = vadd.f32 %v914, %v915
    %v917 = vsel %vm670, %v829, 0.0
    %v918 = vadd.f32 %v916, %v917
    %v919 = vsel %vm670, %v830, 0.0
    %v920 = vadd.f32 %v918, %v919
    %v921 = vsel %vm670, %v831, 0.0
    %v922 = vadd.f32 %v920, %v921
    %v923 = vsel %vm670, %v832, 0.0
    %v924 = vadd.f32 %v922, %v923
    %v925 = vsel %vm670, %v833, 0.0
    %v926 = vadd.f32 %v924, %v925
    %v927 = vsel %vm670, %v834, 0.0
    %v928 = vadd.f32 %v926, %v927
    %v929 = vsel %vm670, %v835, 0.0
    %v930 = vadd.f32 %v928, %v929
    %v931 = vsel %vm670, %v836, 0.0
    %v932 = vadd.f32 %v930, %v931
    %v933 = vsel %vm670, %v837, 0.0
    %v934 = vadd.f32 %v932, %v933
    %v935 = vsel %vm670, %v838, 0.0
    %v936 = vadd.f32 %v934, %v935
    %v937 = vsel %vm670, %v839, 0.0
    %v938 = vadd.f32 %v936, %v937
    %v939 = vsel %vm670, %v840, 0.0
    %v940 = vadd.f32 %v938, %v939
    %v941 = vsel %vm670, %v841, 0.0
    %v942 = vadd.f32 %v940, %v941
    %v943 = vsel %vm670, %v842, 0.0
    %v944 = vadd.f32 %v942, %v943
    %v945 = vsel %vm670, %v843, 0.0
    %v946 = vadd.f32 %v944, %v945
    %v947 = vsel %vm670, %v844, 0.0
    %v948 = vadd.f32 %v946, %v947
    %v949 = vsel %vm670, %v845, 0.0
    %v950 = vadd.f32 %v948, %v949
    %v951 = vsel %vm670, %v846, 0.0
    %v952 = vadd.f32 %v950, %v951
    %v953 = vsel %vm670, %v847, 0.0
    %v954 = vadd.f32 %v952, %v953
    %v955 = vsel %vm670, %v848, 0.0
    %v956 = vadd.f32 %v954, %v955
    %v957 = vsel %vm670, %v849, 0.0
    %v958 = vadd.f32 %v956, %v957
    %v959 = vsel %vm670, %v850, 0.0
    %v960 = vadd.f32 %v958, %v959
    %v961 = vsel %vm670, %v851, 0.0
    %v962 = vadd.f32 %v960, %v961
    %v963 = vsel %vm670, %v852, 0.0
    %v964 = vadd.f32 %v962, %v963
    %v965 = vsel %vm670, %v853, 0.0
    %v966 = vadd.f32 %v964, %v965
    %v967 = vsel %vm670, %v854, 0.0
    %v968 = vadd.f32 %v966, %v967
    %v969 = vsel %vm670, %v855, 0.0
    %v970 = vadd.f32 %v968, %v969
    %v971 = vsel %vm670, %v856, 0.0
    %v972 = vadd.f32 %v970, %v971
    %v973 = vsel %vm670, %v857, 0.0
    %v974 = vadd.f32 %v972, %v973
    %v975 = vsel %vm670, %v858, 0.0
    %v976 = vadd.f32 %v974, %v975
    %v977 = vsel %vm670, %v859, 0.0
    %v978 = vadd.f32 %v976, %v977
    %v979 = vsel %vm670, %v860, 0.0
    %v980 = vadd.f32 %v978, %v979
    %v981 = vsel %vm670, %v861, 0.0
    %v982 = vadd.f32 %v980, %v981
    %v983 = vsel %vm670, %v862, 0.0
    %v984 = vadd.f32 %v982, %v983
    %v985 = vsel %vm670, %v863, 0.0
    %v986 = vadd.f32 %v984, %v985
    %v987 = vsel %vm670, %v864, 0.0
    %v988 = vadd.f32 %v986, %v987
    %v989 = vsel %vm670, %v865, 0.0
    %v990 = vadd.f32 %v988, %v989
    %v991 = vsel %vm670, %v866, 0.0
    %v992 = vadd.f32 %v990, %v991
    %v993 = vsel %vm670, %v867, 0.0
    %v994 = vadd.f32 %v992, %v993
    %v995 = vrot.slane %v994, 4
    %v996 = vadd.f32 %v994, %v995
    %v997 = vrot.slane %v996, 2
    %v998 = vadd.f32 %v996, %v997
    %v999 = vrot.slane %v998, 1
    %v1000 = vadd.f32 %v998, %v999
    %vm1001 = vcmask 1040384
    %v1002 = vsel %vm1001, %v803, %v1000
    %vm1003 = vcmask 91136
    %1004 = vst.msk [vmem:[#allocation2] sm:$0x3] %vm1003, %v1002
    // Predicated region
    $region18: #{tpu_custom_call.1} parent=1 // pred_check
      _
    $region19: #{tpu_custom_call.1} parent=1 // pred_check_branch
      %1006 = sbr.rel (0) target = $region21
    $region20: #{tpu_custom_call.1} parent=1 // pred_region
      _
    $region21: #{tpu_custom_call.1} parent=1 // pred_fallthru
      _
    // Predicated region
    $region22: #{tpu_custom_call.1} parent=1 // pred_check
      _
    $region23: #{tpu_custom_call.1} parent=1 // pred_check_branch
      %1008 = sbr.rel (0) target = $region25
    $region24: #{tpu_custom_call.1} parent=1 // pred_region
      %1010 = vsyncadd [#allocation3], 0
      %s1012 = sshll.u32 [#allocation2], 4
      %s1013 = int_to_ptr.vmem [resolvable:$true] %s1012
      %s1014 = sshll.u32 %s5, 4
      %s1015 = int_to_ptr.hbm [resolvable:$true] %s1014
      %1017 = dma.vmem_to_hbm [thread:$0]  %s1013, 32, %s1015, [#allocation3]
    $region25: #{tpu_custom_call.1} parent=1 // pred_fallthru
      _
    // Predicated region
    $region26: #{tpu_custom_call.1} parent=1 // pred_check
      _
    $region27: #{tpu_custom_call.1} parent=1 // pred_check_branch
      %1019 = sbr.rel (0) target = $region29
    $region28: #{tpu_custom_call.1} parent=1 // pred_region
      _
    $region29: #{tpu_custom_call.1} parent=1 // pred_fallthru
      _
    // Predicated region
    $region30: #{tpu_custom_call.1} parent=1 // pred_check
      _
    $region31: #{tpu_custom_call.1} parent=1 // pred_check_branch
      %1021 = sbr.rel (0) target = $region33
    $region32: #{tpu_custom_call.1} parent=1 // pred_region
      %1023 = dma.done [#allocation3], 32
    $region33: #{tpu_custom_call.1} parent=1 // pred_fallthru
      _
    %1024 = vsyncpa [#allocation3], 1

</llo_original>
